<compile_context>
chip_gen: v5e
topology: v5e:2x2
jax: 0.10.0
libtpu: 0.0.40
codegen_flags: <defaults>
</compile_context>

<pallas_src>
import math

import jax
import jax.numpy as jnp
from jax.experimental import pallas as pl
from jax.experimental.pallas import tpu as pltpu

NUM_HEADS = 1                              # matches Model(num_heads=1)
QK_SCALE = 1.0 / math.sqrt(NUM_HEADS)      # spec scales by 1/sqrt(num_heads), not 1/sqrt(d_k)


def _attn_dropout_kernel(thresh_ref, scale_ref, q_ref, k_ref, v_ref, m_ref,
                         bits_ref, o_ref):
    # q_ref/k_ref: (G, S, D), v_ref: (G, S, Dv), m_ref/bits_ref: (G, S, S)
    q = q_ref[...]
    k = k_ref[...]
    v = v_ref[...]

    # Batched q @ k^T over the head-group axis; contraction is the last dim of
    # BOTH operands, so no explicit transpose is materialized before the MXU.
    s = jnp.einsum("gqd,gkd->gqk", q, k, preferred_element_type=jnp.float32)
    if QK_SCALE != 1.0:   # resolved at trace time (scale == 1 for num_heads == 1)
        s = s * QK_SCALE
    s = s + m_ref[...].astype(jnp.float32)

    # Numerically-stable softmax along the key axis.
    s_max = jnp.max(s, axis=-1, keepdims=True)
    e = jnp.exp(s - s_max)
    attn = e / jnp.sum(e, axis=-1, keepdims=True)

    # Dropout: uniform int32 bits >= threshold  <=>  keep with prob (1 - p).
    # Kept values are scaled by 1/(1-p), precomputed on the host side (SMEM).
    keep = bits_ref[...] >= thresh_ref[0]
    attn = jnp.where(keep, attn * scale_ref[0], 0.0)

    # attn @ value (batched over the head-group axis).
    out = jnp.einsum("gqk,gkd->gqd", attn.astype(v.dtype), v,
                     preferred_element_type=jnp.float32)
    o_ref[...] = out.astype(o_ref.dtype)


@jax.jit
def attention_dropout(query, key, value, attn_mask, dropout_p, seed):
    B, H, S, D = query.shape
    Dv = value.shape[-1]
    BH = B * H

    # Batch all H heads of one batch element per grid step (amortizes the
    # per-step grid overhead; for the shipped shapes the whole problem is a
    # single step).  G must divide H so a group never crosses a batch boundary.
    G = H
    num_steps = BH // G

    q = query.reshape(BH, S, D)
    k = key.reshape(BH, S, D)
    v = value.reshape(BH, S, Dv)

    # Keep the mask at its natural shape; do NOT replicate it B-fold in HBM.
    if attn_mask.shape[0] == B:
        m = attn_mask.reshape(BH, S, S)
        m_index = lambda i: (i, 0, 0)
    else:  # mask is broadcast over batch: keep it (H, S, S)
        m = attn_mask.reshape(H, S, S)
        hg = H // G
        m_index = lambda i: (i % hg, 0, 0)

    # Dropout parameters (requires p < 1; p == 1 would give an infinite scale,
    # matching torch's behavior of zeroing/NaN-ing everything).
    p = jnp.asarray(dropout_p, jnp.float32)
    # Signed-int32 threshold: uniform int32 bits >= thresh keeps with prob (1-p).
    thresh_f = jnp.clip(p * 4294967296.0 - 2147483648.0,
                        -2147483648.0, 2147483520.0)
    thresh = thresh_f.astype(jnp.int32).reshape(1)
    keep_scale = (1.0 / (1.0 - p)).astype(jnp.float32).reshape(1)

    # Dropout bits are drawn here with jax.random (the in-kernel pltpu.prng_*
    # path has no interpret-mode lowering) and bitcast to int32 so the in-kernel
    # keep-decision is a single compare per element.
    bits_u32 = jax.random.bits(jax.random.PRNGKey(seed), (BH, S, S),
                               dtype=jnp.uint32)
    bits = jax.lax.bitcast_convert_type(bits_u32, jnp.int32)

    grid_spec = pltpu.PrefetchScalarGridSpec(
        num_scalar_prefetch=0,
        grid=(num_steps,),
        in_specs=[
            pl.BlockSpec(memory_space=pltpu.MemorySpace.SMEM),    # dropout threshold
            pl.BlockSpec(memory_space=pltpu.MemorySpace.SMEM),    # 1/(1-p)
            pl.BlockSpec((G, S, D), lambda i: (i, 0, 0)),         # q
            pl.BlockSpec((G, S, D), lambda i: (i, 0, 0)),         # k
            pl.BlockSpec((G, S, Dv), lambda i: (i, 0, 0)),        # v
            pl.BlockSpec((G, S, S), m_index),                     # mask
            pl.BlockSpec((G, S, S), lambda i: (i, 0, 0)),         # dropout bits
        ],
        out_specs=pl.BlockSpec((G, S, Dv), lambda i: (i, 0, 0)),
    )

    out = pl.pallas_call(
        _attn_dropout_kernel,
        out_shape=jax.ShapeDtypeStruct((BH, S, Dv), query.dtype),
        grid_spec=grid_spec,
        compiler_params=pltpu.CompilerParams(
            dimension_semantics=("parallel",),   # shardable across TCs (v7x)
        ),
    )(thresh, keep_scale, q, k, v, m, bits)

    return out.reshape(B, H, S, Dv)


if __name__ == "__main__":
    # Shapes consistent with the module's forward:
    #   query (1, 2, 8, 4), key (1, 2, 8, 4), value (1, 2, 8, 8), mask (1, 2, 8, 8)
    B, H, S, D, Dv = 1, 2, 8, 4, 8
    rng = jax.random.PRNGKey(0)
    kq, kk, kv, km = jax.random.split(rng, 4)

    query = jax.random.normal(kq, (B, H, S, D), dtype=jnp.float32)
    key = jax.random.normal(kk, (B, H, S, D), dtype=jnp.float32)
    value = jax.random.normal(kv, (B, H, S, Dv), dtype=jnp.float32)
    attn_mask = jax.nn.softmax(
        jax.random.normal(km, (1, H, S, S), dtype=jnp.float32) * -10000.0, axis=-1)
    dropout_p = 0.5

    out = attention_dropout(query, key, value, attn_mask, dropout_p, 1234)
    out = jax.block_until_ready(out)
    assert out.shape == (B, H, S, Dv)
    assert bool(jnp.all(jnp.isfinite(out)))
    print("KERNEL_OK")
</pallas_src>

<mosaic_0001>
module attributes {stable_mosaic.version = 11 : i64} {
  func.func @_attn_dropout_kernel(%arg0: i32, %arg1: memref<1xi32, #tpu.memory_space<smem>>, %arg2: memref<1xf32, #tpu.memory_space<smem>>, %arg3: memref<2x8x4xf32, #tpu.memory_space<vmem>>, %arg4: memref<2x8x4xf32, #tpu.memory_space<vmem>>, %arg5: memref<2x8x8xf32, #tpu.memory_space<vmem>>, %arg6: memref<2x8x8xf32, #tpu.memory_space<vmem>>, %arg7: memref<2x8x8xi32, #tpu.memory_space<vmem>>, %arg8: memref<2x8x8xf32, #tpu.memory_space<vmem>>) attributes {dimension_semantics = [#tpu.dimension_semantics<parallel>], iteration_bounds = array<i64: 1>, scalar_prefetch = 0 : i64, scratch_operands = 0 : i64, tpu.core_type = #tpu.core_type<tc>, window_params = [{transform_indices = @transform_0, window_bounds = array<i64: 1>}, {transform_indices = @transform_1, window_bounds = array<i64: 1>}, {transform_indices = @transform_2, window_bounds = array<i64: 2, 8, 4>}, {transform_indices = @transform_3, window_bounds = array<i64: 2, 8, 4>}, {transform_indices = @transform_4, window_bounds = array<i64: 2, 8, 8>}, {transform_indices = @transform_5, window_bounds = array<i64: 2, 8, 8>}, {transform_indices = @transform_6, window_bounds = array<i64: 2, 8, 8>}, {transform_indices = @transform_7, window_bounds = array<i64: 2, 8, 8>}]} {
    %c0 = arith.constant 0 : index
    %c0_0 = arith.constant 0 : index
    %c0_1 = arith.constant 0 : index
    %0 = vector.load %arg3[%c0, %c0_0, %c0_1] : memref<2x8x4xf32, #tpu.memory_space<vmem>>, vector<2x8x4xf32>
    %c0_2 = arith.constant 0 : index
    %c0_3 = arith.constant 0 : index
    %c0_4 = arith.constant 0 : index
    %1 = vector.load %arg4[%c0_2, %c0_3, %c0_4] : memref<2x8x4xf32, #tpu.memory_space<vmem>>, vector<2x8x4xf32>
    %c0_5 = arith.constant 0 : index
    %c0_6 = arith.constant 0 : index
    %c0_7 = arith.constant 0 : index
    %2 = vector.load %arg5[%c0_5, %c0_6, %c0_7] : memref<2x8x8xf32, #tpu.memory_space<vmem>>, vector<2x8x8xf32>
    "tpu.trace_start"() <{level = 10 : i32, message = "gqd,gkd->gqk"}> : () -> ()
    %cst = arith.constant dense<0.000000e+00> : vector<2x8x8xf32>
    %3 = tpu.matmul %0, %1, %cst {dimension_numbers = #tpu.dot_dimension_numbers<[2], [2], [1], [1], [0, 0, 0, 1, 1, 1], [0], [0]>} : vector<2x8x4xf32>, vector<2x8x4xf32>, vector<2x8x8xf32> -> vector<2x8x8xf32>
    "tpu.trace_stop"() : () -> ()
    %c0_8 = arith.constant 0 : index
    %c0_9 = arith.constant 0 : index
    %c0_10 = arith.constant 0 : index
    %4 = vector.load %arg6[%c0_8, %c0_9, %c0_10] : memref<2x8x8xf32, #tpu.memory_space<vmem>>, vector<2x8x8xf32>
    %5 = arith.addf %3, %4 : vector<2x8x8xf32>
    %cst_11 = arith.constant dense<0xFF800000> : vector<2x8xf32>
    %6 = vector.multi_reduction <maximumf>, %5, %cst_11 [2] : vector<2x8x8xf32> to vector<2x8xf32>
    %7 = vector.shape_cast %6 : vector<2x8xf32> to vector<2x8x1xf32>
    %8 = vector.broadcast %7 : vector<2x8x1xf32> to vector<2x8x8xf32>
    %9 = arith.subf %5, %8 : vector<2x8x8xf32>
    %10 = math.exp %9 : vector<2x8x8xf32>
    %cst_12 = arith.constant dense<0.000000e+00> : vector<2x8xf32>
    %11 = vector.multi_reduction <add>, %10, %cst_12 [2] : vector<2x8x8xf32> to vector<2x8xf32>
    %12 = vector.shape_cast %11 : vector<2x8xf32> to vector<2x8x1xf32>
    %13 = vector.broadcast %12 : vector<2x8x1xf32> to vector<2x8x8xf32>
    %14 = arith.divf %10, %13 : vector<2x8x8xf32>
    %c0_13 = arith.constant 0 : index
    %c0_14 = arith.constant 0 : index
    %c0_15 = arith.constant 0 : index
    %15 = vector.load %arg7[%c0_13, %c0_14, %c0_15] : memref<2x8x8xi32, #tpu.memory_space<vmem>>, vector<2x8x8xi32>
    %c0_16 = arith.constant 0 : index
    %16 = memref.load %arg1[%c0_16] : memref<1xi32, #tpu.memory_space<smem>>
    %17 = vector.broadcast %16 : i32 to vector<2x8x8xi32>
    %18 = arith.cmpi sge, %15, %17 : vector<2x8x8xi32>
    %c0_17 = arith.constant 0 : index
    %19 = memref.load %arg2[%c0_17] : memref<1xf32, #tpu.memory_space<smem>>
    %20 = vector.broadcast %19 : f32 to vector<2x8x8xf32>
    %21 = arith.mulf %14, %20 : vector<2x8x8xf32>
    %cst_18 = arith.constant 0.000000e+00 : f32
    %22 = vector.broadcast %cst_18 : f32 to vector<2x8x8xf32>
    %23 = arith.select %18, %21, %22 : vector<2x8x8xi1>, vector<2x8x8xf32>
    "tpu.trace_start"() <{level = 10 : i32, message = "gqk,gkd->gqd"}> : () -> ()
    %cst_19 = arith.constant dense<0.000000e+00> : vector<2x8x8xf32>
    %24 = tpu.matmul %23, %2, %cst_19 {dimension_numbers = #tpu.dot_dimension_numbers<[2], [1], [1], [2], [0, 0, 0, 1, 1, 2], [0], [0]>} : vector<2x8x8xf32>, vector<2x8x8xf32>, vector<2x8x8xf32> -> vector<2x8x8xf32>
    "tpu.trace_stop"() : () -> ()
    %c0_20 = arith.constant 0 : index
    %c0_21 = arith.constant 0 : index
    %c0_22 = arith.constant 0 : index
    %25 = vector.load %arg8[%c0_20, %c0_21, %c0_22] : memref<2x8x8xf32, #tpu.memory_space<vmem>>, vector<2x8x8xf32>
    tpu.vector_store %arg8[%c0_20, %c0_21, %c0_22], %24 {strides = array<i32>} : memref<2x8x8xf32, #tpu.memory_space<vmem>>, vector<2x8x8xf32>,
    return
  }
  func.func @transform_0(%arg0: i32) -> i32 {
    %c0_i32 = arith.constant 0 : i32
    %c0_i32_0 = arith.constant 0 : i32
    return %c0_i32 : i32
  }
  func.func @transform_1(%arg0: i32) -> i32 {
    %c0_i32 = arith.constant 0 : i32
    %c0_i32_0 = arith.constant 0 : i32
    return %c0_i32 : i32
  }
  func.func @transform_2(%arg0: i32) -> (i32, i32, i32) {
    %c0_i32 = arith.constant 0 : i32
    %c0_i32_0 = arith.constant 0 : i32
    %c0_i32_1 = arith.constant 0 : i32
    return %arg0, %c0_i32, %c0_i32_0 : i32, i32, i32
  }
  func.func @transform_3(%arg0: i32) -> (i32, i32, i32) {
    %c0_i32 = arith.constant 0 : i32
    %c0_i32_0 = arith.constant 0 : i32
    %c0_i32_1 = arith.constant 0 : i32
    return %arg0, %c0_i32, %c0_i32_0 : i32, i32, i32
  }
  func.func @transform_4(%arg0: i32) -> (i32, i32, i32) {
    %c0_i32 = arith.constant 0 : i32
    %c0_i32_0 = arith.constant 0 : i32
    %c0_i32_1 = arith.constant 0 : i32
    return %arg0, %c0_i32, %c0_i32_0 : i32, i32, i32
  }
  func.func @transform_5(%arg0: i32) -> (i32, i32, i32) {
    %c0_i32 = arith.constant 0 : i32
    %c0_i32_0 = arith.constant 0 : i32
    %c0_i32_1 = arith.constant 0 : i32
    return %arg0, %c0_i32, %c0_i32_0 : i32, i32, i32
  }
  func.func @transform_6(%arg0: i32) -> (i32, i32, i32) {
    %c0_i32 = arith.constant 0 : i32
    %c0_i32_0 = arith.constant 0 : i32
    %c0_i32_1 = arith.constant 0 : i32
    return %arg0, %c0_i32, %c0_i32_0 : i32, i32, i32
  }
  func.func @transform_7(%arg0: i32) -> (i32, i32, i32) {
    %c0_i32 = arith.constant 0 : i32
    %c0_i32_0 = arith.constant 0 : i32
    %c0_i32_1 = arith.constant 0 : i32
    return %arg0, %c0_i32, %c0_i32_0 : i32, i32, i32
  }
}

</mosaic_0001>

<llo_original>
// kernel: attention_dropout.1
$region0: #{attention_dropout.1}
  #allocation0 [shape = 'u32[]', space=smem, size = 0x4, offset = 0x4, fixed_abs, tag = 'smem constant byte address 0x4 - core index']
  #allocation1 [shape = 'u32[72,128]{1,0:T(1,128)}', space=vmem, size = 0x9000, scoped, tag = 'internal scratch']
  #allocation2 [shape = 's32[1]{0:T(128)S(6)}', space=smem, size = 0x200, scoped, tag = 'scoped memory for attention_dropout.1']
  #allocation3 [shape = 'f32[1]{0:T(128)S(6)}', space=smem, size = 0x200, scoped, tag = 'scoped memory for attention_dropout.1']
  %s0 = inlined_call_operand.<no memory space> [shape: s32[1], index: 0, kind: input, shape index: {}]
  %s1 = inlined_call_operand.<no memory space> [shape: f32[1], index: 1, kind: input, shape index: {}]
  %s2 = inlined_call_operand.vmem [shape: f32[2,8,4], index: 2, kind: input, shape index: {}]
  %s3 = inlined_call_operand.vmem [shape: f32[2,8,4], index: 3, kind: input, shape index: {}]
  %s4 = inlined_call_operand.vmem [shape: f32[2,8,8], index: 4, kind: input, shape index: {}]
  %s5 = inlined_call_operand.vmem [shape: f32[2,8,8], index: 5, kind: input, shape index: {}]
  %s6 = inlined_call_operand.vmem [shape: s32[2,8,8], index: 6, kind: input, shape index: {}]
  %s7 = inlined_call_operand.hbm [shape: f32[2,8,8], index: 7, kind: output, shape index: {}]
  %s8 = sld [smem:[#allocation0]]
  $region38: #{attention_dropout.1} parent=0
    _
  %s10 = ssub.s32 1, %s8
  %s11 = scalar_select 0, %s10, %s8
  %12 = sst [smem:[#allocation2]] %s0
  %13 = sst [smem:[#allocation3]] %s1
  $region1: #{attention_dropout.1} parent=0
    #allocation4 [shape = 'u8[8192]{0}', space=vmem, size = 0x2000, scoped, tag = 'output window, operand 0, single buffered']
    #allocation5 [shape = 's32[1]{0}', space=sflag, size = 0x4, scoped, tag = 'scoped memory for attention_dropout.1']
    %14 = vsyncpa [#allocation5], 0
    // Predicated region
    $region2: #{attention_dropout.1} parent=1 // pred_check
      _
    $region3: #{attention_dropout.1} parent=1 // pred_check_branch
      %16 = sbr.rel (0) target = $region5
    $region4: #{attention_dropout.1} parent=1 // pred_region
      _
    $region5: #{attention_dropout.1} parent=1 // pred_fallthru
      _
    // Predicated region
    $region6: #{attention_dropout.1} parent=1 // pred_check
      _
    $region7: #{attention_dropout.1} parent=1 // pred_check_branch
      %18 = sbr.rel (0) target = $region9
    $region8: #{attention_dropout.1} parent=1 // pred_region
      _
    $region9: #{attention_dropout.1} parent=1 // pred_fallthru
      _
    // Predicated region
    $region10: #{attention_dropout.1} parent=1 // pred_check
      _
    $region11: #{attention_dropout.1} parent=1 // pred_check_branch
      %20 = sbr.rel (0) target = $region13
    $region12: #{attention_dropout.1} parent=1 // pred_region
      _
    $region13: #{attention_dropout.1} parent=1 // pred_fallthru
      _
    // Predicated region
    $region14: #{attention_dropout.1} parent=1 // pred_check
      _
    $region15: #{attention_dropout.1} parent=1 // pred_check_branch
      %22 = sbr.rel (0) target = $region17
    $region16: #{attention_dropout.1} parent=1 // pred_region
      _
    $region17: #{attention_dropout.1} parent=1 // pred_fallthru
      _
    // Predicated region
    $region18: #{attention_dropout.1} parent=1 // pred_check
      _
    $region19: #{attention_dropout.1} parent=1 // pred_check_branch
      %24 = sbr.rel (0) target = $region21
    $region20: #{attention_dropout.1} parent=1 // pred_region
      _
    $region21: #{attention_dropout.1} parent=1 // pred_fallthru
      _
    // Predicated region
    $region22: #{attention_dropout.1} parent=1 // pred_check
      _
    $region23: #{attention_dropout.1} parent=1 // pred_check_branch
      %26 = sbr.rel (0) target = $region25
    $region24: #{attention_dropout.1} parent=1 // pred_region
      _
    $region25: #{attention_dropout.1} parent=1 // pred_fallthru
      _
    // Predicated region
    $region26: #{attention_dropout.1} parent=1 // pred_check
      _
    $region27: #{attention_dropout.1} parent=1 // pred_check_branch
      %28 = sbr.rel (0) target = $region29
    $region28: #{attention_dropout.1} parent=1 // pred_region
      _
    $region29: #{attention_dropout.1} parent=1 // pred_fallthru
      _
    %v29 = vld [vmem:[%s2] sm:$0xff]
    %v30 = vld [vmem:[%s2 + $0x8] sm:$0xff]
    %v31 = vld [vmem:[%s3] sm:$0xff]
    %v32 = vld [vmem:[%s3 + $0x8] sm:$0xff]
    %v33 = vld [vmem:[%s4] sm:$0xff]
    %v34 = vld [vmem:[%s4 + $0x8] sm:$0xff]
    %v35 = vld [vmem:[%s5] sm:$0xff]
    %v36 = vld [vmem:[%s5 + $0x8] sm:$0xff]
    %vm37 = vcmask 31744
    %v39 = vsel %vm37, %v29, 0
    %v42 = vsel %vm37, %v31, 0
    %44 = vmatpush.xpose.msra.mxu0 0.0
    %45 = vmatpush.xpose.msra.mxu0 0.0
    %46 = vmatpush.xpose.msra.mxu0 0.0
    %47 = vmatpush.xpose.msra.mxu0 0.0
    %48 = vmatpush.xpose.msra.mxu0 0.0
    %49 = vmatpush.xpose.msra.mxu0 0.0
    %50 = vmatpush.xpose.msra.mxu0 0.0
    %51 = vmatpush.xpose.msra.mxu0 0.0
    %52 = vmatpush.xpose.msra.mxu0 0.0
    %53 = vmatpush.xpose.msra.mxu0 0.0
    %54 = vmatpush.xpose.msra.mxu0 0.0
    %55 = vmatpush.xpose.msra.mxu0 0.0
    %56 = vmatpush.xpose.msra.mxu0 0.0
    %57 = vmatpush.xpose.msra.mxu0 0.0
    %58 = vmatpush.xpose.msra.mxu0 0.0
    %59 = vmatpush.xpose.msra.mxu0 %v42
    %60 = vmatmul.f32.gmra.mxu0 %v39
    %v61 = vpop.f32.mrf.mxu0
    %v62 = vadd.f32 %v35, %v61
    %63 = vdwg.mxu0
    %v65 = vsel %vm37, %v30, 0
    %v68 = vsel %vm37, %v32, 0
    %70 = vmatpush.xpose.msra.mxu0 0.0
    %71 = vmatpush.xpose.msra.mxu0 0.0
    %72 = vmatpush.xpose.msra.mxu0 0.0
    %73 = vmatpush.xpose.msra.mxu0 0.0
    %74 = vmatpush.xpose.msra.mxu0 0.0
    %75 = vmatpush.xpose.msra.mxu0 0.0
    %76 = vmatpush.xpose.msra.mxu0 0.0
    %77 = vmatpush.xpose.msra.mxu0 0.0
    %78 = vmatpush.xpose.msra.mxu0 0.0
    %79 = vmatpush.xpose.msra.mxu0 0.0
    %80 = vmatpush.xpose.msra.mxu0 0.0
    %81 = vmatpush.xpose.msra.mxu0 0.0
    %82 = vmatpush.xpose.msra.mxu0 0.0
    %83 = vmatpush.xpose.msra.mxu0 0.0
    %84 = vmatpush.xpose.msra.mxu0 0.0
    %85 = vmatpush.xpose.msra.mxu0 %v68
    %86 = vmatmul.f32.gmra.mxu0 %v65
    %v87 = vpop.f32.mrf.mxu0
    %v88 = vadd.f32 %v36, %v87
    %89 = vdwg.mxu0
    %vm90 = vcmask 64512
    %v91 = vsel %vm90, %v62, -inf
    %92 = vmax.xlane.f32.xlu0 %v91
    %v93 = vpop.xlane.xlu0 %92
    %v94 = vsel %vm90, %v88, -inf
    %95 = vmax.xlane.f32.xlu0 %v94
    %v96 = vpop.xlane.xlu0 %95
    %v97 = vsub.f32 %v62, %v93
    %v98 = vsub.f32 %v88, %v96
    %v99 = vmul.f32 %v97, 1.442695
    %v100 = vpow.pop %v99
    %v101 = vmul.f32 %v98, 1.442695
    %v102 = vpow.pop %v101
    %v103 = vsel %vm90, %v100, 0.0
    %104 = vadd.xlane.f32.xlu0 %v103
    %v105 = vpop.xlane.xlu0 %104
    %v106 = vsel %vm90, %v102, 0.0
    %107 = vadd.xlane.f32.xlu0 %v106
    %v108 = vpop.xlane.xlu0 %107
    %v109 = vrcp.pop %v105
    %v110 = vmul.f32 %v105, %v109
    %v111 = vsub.f32 1.0, %v110
    %v112 = vmul.f32 %v109, %v111
    %v113 = vadd.f32 %v109, %v112
    %vm114 = vweird.f32 %v105
    %vm115 = vweird.f32 %v109
    %vm116 = vmor %vm114, %vm115
    %v117 = vsel %vm116, %v109, %v113
    %v118 = vand.u32 2147483647, %v105
    %vm119 = vcmp.eq.f32.partialorder %v118, 8.507059e+37
    %v120 = vand.u32 %v105, 2147483648
    %v121 = vor.u32 1.1754944e-38, %v120
    %v122 = vsel %vm119, %v121, %v117
    %v123 = vmul.f32 %v100, %v122
    %v124 = vrcp.pop %v108
    %v125 = vmul.f32 %v108, %v124
    %v126 = vsub.f32 1.0, %v125
    %v127 = vmul.f32 %v124, %v126
    %v128 = vadd.f32 %v124, %v127
    %vm129 = vweird.f32 %v108
    %vm130 = vweird.f32 %v124
    %vm131 = vmor %vm129, %vm130
    %v132 = vsel %vm131, %v124, %v128
    %v133 = vand.u32 2147483647, %v108
    %vm134 = vcmp.eq.f32.partialorder %v133, 8.507059e+37
    %v135 = vand.u32 %v108, 2147483648
    %v136 = vor.u32 1.1754944e-38, %v135
    %v137 = vsel %vm134, %v136, %v132
    %v138 = vmul.f32 %v102, %v137
    %v139 = vld [vmem:[%s6] sm:$0xff]
    %v140 = vld [vmem:[%s6 + $0x8] sm:$0xff]
    %s141 = sld [smem:[#allocation2]]
    %v142 = vstv %s141
    %vm143 = vcmp.ge.s32.totalorder %v139, %v142
    %vm144 = vcmp.ge.s32.totalorder %v140, %v142
    %s145 = sld [smem:[#allocation3]]
    %v146 = vstv %s145
    %v147 = vmul.f32 %v123, %v146
    %v148 = vmul.f32 %v138, %v146
    %v149 = vsel %vm143, %v147, 0.0
    %v150 = vsel %vm144, %v148, 0.0
    %v152 = vsel %vm90, %v149, 0
    %154 = vmatpush.msra.mxu0 0.0
    %155 = vmatpush.msra.mxu0 0.0
    %156 = vmatpush.msra.mxu0 0.0
    %157 = vmatpush.msra.mxu0 0.0
    %158 = vmatpush.msra.mxu0 0.0
    %159 = vmatpush.msra.mxu0 0.0
    %160 = vmatpush.msra.mxu0 0.0
    %161 = vmatpush.msra.mxu0 0.0
    %162 = vmatpush.msra.mxu0 0.0
    %163 = vmatpush.msra.mxu0 0.0
    %164 = vmatpush.msra.mxu0 0.0
    %165 = vmatpush.msra.mxu0 0.0
    %166 = vmatpush.msra.mxu0 0.0
    %167 = vmatpush.msra.mxu0 0.0
    %168 = vmatpush.msra.mxu0 0.0
    %169 = vmatpush.msra.mxu0 %v33
    %170 = vmatmul.f32.gmra.mxu0 %v152
    %v171 = vpop.f32.mrf.mxu0
    %v172 = vadd.f32 0.0, %v171
    %173 = vdwg.mxu0
    %v175 = vsel %vm90, %v150, 0
    %177 = vmatpush.msra.mxu0 0.0
    %178 = vmatpush.msra.mxu0 0.0
    %179 = vmatpush.msra.mxu0 0.0
    %180 = vmatpush.msra.mxu0 0.0
    %181 = vmatpush.msra.mxu0 0.0
    %182 = vmatpush.msra.mxu0 0.0
    %183 = vmatpush.msra.mxu0 0.0
    %184 = vmatpush.msra.mxu0 0.0
    %185 = vmatpush.msra.mxu0 0.0
    %186 = vmatpush.msra.mxu0 0.0
    %187 = vmatpush.msra.mxu0 0.0
    %188 = vmatpush.msra.mxu0 0.0
    %189 = vmatpush.msra.mxu0 0.0
    %190 = vmatpush.msra.mxu0 0.0
    %191 = vmatpush.msra.mxu0 0.0
    %192 = vmatpush.msra.mxu0 %v34
    %193 = vmatmul.f32.gmra.mxu0 %v175
    %v194 = vpop.f32.mrf.mxu0
    %v195 = vadd.f32 0.0, %v194
    %196 = vdwg.mxu0
    %197 = vst.msk [vmem:[#allocation4] sm:$0xff] %vm90, %v172
    %198 = vst.msk [vmem:[#allocation4 + $0x8] sm:$0xff] %vm90, %v195
    // Predicated region
    $region30: #{attention_dropout.1} parent=1 // pred_check
      _
    $region31: #{attention_dropout.1} parent=1 // pred_check_branch
      %200 = sbr.rel (0) target = $region33
    $region32: #{attention_dropout.1} parent=1 // pred_region
      %202 = vsyncadd [#allocation5], 0
      %s203 = sshll.u32 [#allocation4], 4
      %s204 = int_to_ptr.vmem [resolvable:$true] %s203
      %s205 = sshll.u32 %s7, 4
      %s206 = int_to_ptr.hbm [resolvable:$true] %s205
      %211 = dma.vmem_to_hbm [thread:$0]  %s204, 256, %s206, [#allocation5], 128, 128, 8
    $region33: #{attention_dropout.1} parent=1 // pred_fallthru
      _
    // Predicated region
    $region34: #{attention_dropout.1} parent=1 // pred_check
      _
    $region35: #{attention_dropout.1} parent=1 // pred_check_branch
      %213 = sbr.rel (0) target = $region37
    $region36: #{attention_dropout.1} parent=1 // pred_region
      %215 = dma.done [#allocation5], 256
    $region37: #{attention_dropout.1} parent=1 // pred_fallthru
      _
    %216 = vsyncpa [#allocation5], 1

</llo_original>
